<compile_context>
chip_gen: v5e
topology: v5e:2x2
jax: 0.10.0
libtpu: 0.0.40
codegen_flags: <defaults>
</compile_context>

<pallas_src>
import functools

import jax
import jax.numpy as jnp
from jax.experimental import pallas as pl
from jax.experimental.pallas import tpu as pltpu


def _make_ce_kernel(num_classes, tile_pix, out_lanes, valid_pix):
    """Builds the kernel with static shape parameters closed over."""

    def _ce_kernel(logits_ref, tgt_ref, out_ref):
        j = pl.program_id(1)  # pixel-tile index

        # (C, TILE): classes on sublanes, pixels on lanes. Upcast in-kernel.
        x = logits_ref[0].astype(jnp.float32)
        tgt = tgt_ref[0]  # (1, TILE) int32

        # log-sum-exp over the class (sublane) axis, per pixel column.
        m = jnp.max(x, axis=0, keepdims=True)                              # (1, TILE)
        lse = jnp.log(jnp.sum(jnp.exp(x - m), axis=0, keepdims=True))      # (1, TILE)

        # Gather the target-class logit via a class-iota select (no logp tensor).
        cls = jax.lax.broadcasted_iota(jnp.int32, (num_classes, tile_pix), 0)
        x_t = jnp.sum(jnp.where(cls == tgt, x, 0.0), axis=0, keepdims=True)  # (1, TILE)

        nll = (m + lse) - x_t                                               # (1, TILE)

        # Mask the ragged tail of the pixel axis (garbage in OOB block region).
        pix = j * tile_pix + jax.lax.broadcasted_iota(jnp.int32, (1, tile_pix), 1)
        nll = jnp.where(pix < valid_pix, nll, 0.0)

        # Fold the tile into a lane-dense (1, out_lanes) partial sum and store
        # it unmasked (128-wide vst) into this tile's own output block.
        partial = jnp.sum(
            nll.reshape(tile_pix // out_lanes, out_lanes), axis=0, keepdims=True
        )
        out_ref[0, 0] = partial

    return _ce_kernel


@functools.partial(jax.jit, static_argnames=("tile_pixels",))
def cross_entropy_loss_2d(outputs, targets, tile_pixels=65536):
    """outputs: (N, C, H, W) float; targets: (N, H, W) int. Returns scalar f32.

    Equivalent to nn.NLLLoss2d(weight=None)(F.log_softmax(outputs, dim=1), targets)
    i.e. mean over all pixels of -log_softmax(outputs)[target].
    """
    N, C, H, W = outputs.shape
    P_hw = H * W
    P = N * P_hw

    # Free, contiguous reshapes — no transpose, no pad, no extra HBM pass.
    logits = outputs.reshape(N, C, P_hw)
    tgt = targets.astype(jnp.int32).reshape(N, 1, P_hw)

    # Pick the pixel tile: largest multiple of 128 that (a) fits in P_hw,
    # (b) keeps a double-buffered logits block <= ~4 MiB (safe on v5e/v6e/v7x
    # scoped-VMEM defaults), (c) respects the requested cap.
    if P_hw >= 128:
        max_block_bytes = 4 * 1024 * 1024
        vmem_cap = max(128, ((max_block_bytes // (4 * C)) // 128) * 128)
        tile = min(tile_pixels, vmem_cap, (P_hw // 128) * 128)
        tile = max(tile, 128)
        out_lanes = 128
    else:
        # Tiny spatial extent: one block spanning the full (non-128-aligned) axis.
        tile = P_hw
        out_lanes = P_hw
    n_tiles = pl.cdiv(P_hw, tile)

    kernel = _make_ce_kernel(C, tile, out_lanes, P_hw)

    partials = pl.pallas_call(
        kernel,
        out_shape=jax.ShapeDtypeStruct((N, n_tiles, 1, out_lanes), jnp.float32),
        grid=(N, n_tiles),
        in_specs=[
            pl.BlockSpec((1, C, tile), lambda n, j: (n, 0, j)),
            pl.BlockSpec((1, 1, tile), lambda n, j: (n, 0, j)),
        ],
        out_specs=pl.BlockSpec((1, 1, 1, out_lanes), lambda n, j: (n, j, 0, 0)),
        compiler_params=pltpu.CompilerParams(
            dimension_semantics=("parallel", "parallel"),
        ),
    )(logits, tgt)

    # weight=None, reduction='mean' (size_average) => divide by total pixel count.
    # TODO(synk): PyTorch's ignore_index (-100) semantics not implemented (not
    # exercised by the reference module either).
    return (jnp.sum(partials) / jnp.float32(P)).astype(jnp.float32)


def _reference(outputs, targets):
    # Pure-JAX reference: mean over pixels of -log_softmax(outputs, axis=1)[target]
    logp = jax.nn.log_softmax(outputs.astype(jnp.float32), axis=1)  # (N,C,H,W)
    gathered = jnp.take_along_axis(
        logp, targets[:, None, :, :].astype(jnp.int32), axis=1
    )[:, 0]
    return -jnp.mean(gathered)


if __name__ == "__main__":
    key = jax.random.PRNGKey(0)
    k1, k2 = jax.random.split(key)

    N, C, H, W = 2, 4, 16, 16
    outputs = jax.random.normal(k1, (N, C, H, W), dtype=jnp.float32)
    targets = jax.random.randint(k2, (N, H, W), 0, C, dtype=jnp.int32)

    loss = cross_entropy_loss_2d(outputs, targets)
    jax.block_until_ready(loss)

    ref = _reference(outputs, targets)
    assert jnp.allclose(loss, ref, rtol=1e-5, atol=1e-5), (loss, ref)

    print("KERNEL_OK")
</pallas_src>

<mosaic_0001>
module attributes {stable_mosaic.version = 11 : i64} {
  func.func @_ce_kernel(%arg0: i32, %arg1: i32, %arg2: memref<1x4x256xf32, #tpu.memory_space<vmem>>, %arg3: memref<1x1x256xi32, #tpu.memory_space<vmem>>, %arg4: memref<1x1x1x128xf32, #tpu.memory_space<vmem>>) attributes {dimension_semantics = [#tpu.dimension_semantics<parallel>, #tpu.dimension_semantics<parallel>], iteration_bounds = array<i64: 2, 1>, scalar_prefetch = 0 : i64, scratch_operands = 0 : i64, tpu.core_type = #tpu.core_type<tc>, window_params = [{transform_indices = @transform_0, window_bounds = array<i64: 1, 4, 256>}, {transform_indices = @transform_1, window_bounds = array<i64: 1, 1, 256>}, {transform_indices = @transform_2, window_bounds = array<i64: 1, 1, 1, 128>}]} {
    %c0 = arith.constant 0 : index
    %c0_0 = arith.constant 0 : index
    %c0_1 = arith.constant 0 : index
    %0 = vector.load %arg2[%c0, %c0_0, %c0_1] : memref<1x4x256xf32, #tpu.memory_space<vmem>>, vector<1x4x256xf32>
    %1 = vector.shape_cast %0 : vector<1x4x256xf32> to vector<4x256xf32>
    %c0_2 = arith.constant 0 : index
    %c0_3 = arith.constant 0 : index
    %c0_4 = arith.constant 0 : index
    %2 = vector.load %arg3[%c0_2, %c0_3, %c0_4] : memref<1x1x256xi32, #tpu.memory_space<vmem>>, vector<1x1x256xi32>
    %3 = vector.shape_cast %2 : vector<1x1x256xi32> to vector<1x256xi32>
    %cst = arith.constant dense<0xFF800000> : vector<256xf32>
    %4 = vector.multi_reduction <maximumf>, %1, %cst [0] : vector<4x256xf32> to vector<256xf32>
    %5 = vector.shape_cast %4 : vector<256xf32> to vector<1x256xf32>
    %6 = vector.broadcast %5 : vector<1x256xf32> to vector<4x256xf32>
    %7 = arith.subf %1, %6 : vector<4x256xf32>
    %8 = math.exp %7 : vector<4x256xf32>
    %cst_5 = arith.constant dense<0.000000e+00> : vector<256xf32>
    %9 = vector.multi_reduction <add>, %8, %cst_5 [0] : vector<4x256xf32> to vector<256xf32>
    %10 = vector.shape_cast %9 : vector<256xf32> to vector<1x256xf32>
    %11 = math.log %10 : vector<1x256xf32>
    %12 = tpu.iota {dimensions = array<i32: 0>} : vector<4x256xi32>
    %13 = vector.broadcast %3 : vector<1x256xi32> to vector<4x256xi32>
    %14 = arith.cmpi eq, %12, %13 : vector<4x256xi32>
    %cst_6 = arith.constant 0.000000e+00 : f32
    %15 = vector.broadcast %cst_6 : f32 to vector<4x256xf32>
    %16 = arith.select %14, %1, %15 : vector<4x256xi1>, vector<4x256xf32>
    %cst_7 = arith.constant dense<0.000000e+00> : vector<256xf32>
    %17 = vector.multi_reduction <add>, %16, %cst_7 [0] : vector<4x256xf32> to vector<256xf32>
    %18 = vector.shape_cast %17 : vector<256xf32> to vector<1x256xf32>
    %19 = arith.addf %5, %11 : vector<1x256xf32>
    %20 = arith.subf %19, %18 : vector<1x256xf32>
    %c256_i32 = arith.constant 256 : i32
    %21 = arith.muli %arg1, %c256_i32 : i32
    %22 = tpu.iota {dimensions = array<i32: 1>} : vector<1x256xi32>
    %23 = vector.broadcast %21 : i32 to vector<1x256xi32>
    %24 = arith.addi %23, %22 : vector<1x256xi32>
    %c256_i32_8 = arith.constant 256 : i32
    %25 = vector.broadcast %c256_i32_8 : i32 to vector<1x256xi32>
    %26 = arith.cmpi slt, %24, %25 : vector<1x256xi32>
    %cst_9 = arith.constant 0.000000e+00 : f32
    %27 = vector.broadcast %cst_9 : f32 to vector<1x256xf32>
    %28 = arith.select %26, %20, %27 : vector<1x256xi1>, vector<1x256xf32>
    %29 = vector.shape_cast %28 : vector<1x256xf32> to vector<2x128xf32>
    %cst_10 = arith.constant dense<0.000000e+00> : vector<128xf32>
    %30 = vector.multi_reduction <add>, %29, %cst_10 [0] : vector<2x128xf32> to vector<128xf32>
    %31 = vector.shape_cast %30 : vector<128xf32> to vector<1x128xf32>
    %c0_11 = arith.constant 0 : index
    %c0_12 = arith.constant 0 : index
    %c0_13 = arith.constant 0 : index
    %c0_14 = arith.constant 0 : index
    %32 = vector.load %arg4[%c0_11, %c0_12, %c0_13, %c0_14] : memref<1x1x1x128xf32, #tpu.memory_space<vmem>>, vector<1x1x1x128xf32>
    %33 = vector.shape_cast %32 : vector<1x1x1x128xf32> to vector<1x128xf32>
    %34 = vector.shape_cast %31 : vector<1x128xf32> to vector<1x1x1x128xf32>
    tpu.vector_store %arg4[%c0_11, %c0_12, %c0_13, %c0_14], %34 {strides = array<i32>} : memref<1x1x1x128xf32, #tpu.memory_space<vmem>>, vector<1x1x1x128xf32>,
    return
  }
  func.func @transform_0(%arg0: i32, %arg1: i32) -> (i32, i32, i32) {
    %c0_i32 = arith.constant 0 : i32
    %c0_i32_0 = arith.constant 0 : i32
    return %arg0, %c0_i32, %arg1 : i32, i32, i32
  }
  func.func @transform_1(%arg0: i32, %arg1: i32) -> (i32, i32, i32) {
    %c0_i32 = arith.constant 0 : i32
    %c0_i32_0 = arith.constant 0 : i32
    return %arg0, %c0_i32, %arg1 : i32, i32, i32
  }
  func.func @transform_2(%arg0: i32, %arg1: i32) -> (i32, i32, i32, i32) {
    %c0_i32 = arith.constant 0 : i32
    %c0_i32_0 = arith.constant 0 : i32
    %c0_i32_1 = arith.constant 0 : i32
    return %arg0, %arg1, %c0_i32, %c0_i32_0 : i32, i32, i32, i32
  }
}

</mosaic_0001>

<llo_original>
// kernel: cross_entropy_loss_2d.1
$region0: #{cross_entropy_loss_2d.1}
  #allocation0 [shape = 'u32[]', space=smem, size = 0x4, offset = 0x4, fixed_abs, tag = 'smem constant byte address 0x4 - core index']
  #allocation1 [shape = 'u32[72,128]{1,0:T(1,128)}', space=vmem, size = 0x9000, scoped, tag = 'internal scratch']
  %s0 = inlined_call_operand.vmem [shape: f32[2,4,256], index: 0, kind: input, shape index: {}]
  %s1 = inlined_call_operand.vmem [shape: s32[2,1,256], index: 1, kind: input, shape index: {}]
  %s2 = inlined_call_operand.vmem [shape: f32[2,1,1,128], index: 2, kind: output, shape index: {}]
  %s3 = sld [smem:[#allocation0]]
  $region41: #{cross_entropy_loss_2d.1} parent=0
    _
  %s5 = ssub.s32 1, %s3
  %s6 = scalar_select 0, %s5, %s3
  loop: start=0, step=1, limit=4
  $region2: #{cross_entropy_loss_2d.1} parent=0 // loop_pre_header
    _
  $region3: #{cross_entropy_loss_2d.1} parent=0 // loop_header
    %s8 = sphi 0, %s12
    %p9 = scmp.ge.s32.totalorder %s8, 4
    %s15 = sphi 0, %s27
    %s16 = sphi 0, %s23
    %s17 = sphi 0, %s15
    %s18 = sphi 0, %s16
    %s19 = sphi 0, %s17
    %s20 = sphi 0, %s18
    %s32 = sphi 0, %s34
    %s35 = sphi 0, %s32
    %s36 = sphi 0, %s35
    %s52 = sphi 0, %s36
    %s60 = sphi 0, %s62
    %s63 = sphi 0, %s60
    %s64 = sphi 0, %s63
    %s80 = sphi 0, %s64
    %s88 = sphi 0, %s90
    %s91 = sphi 0, %s88
    %s92 = sphi 0, %s91
    %s108 = sphi 0, %s92
  $region4: #{cross_entropy_loss_2d.1} parent=0 // loop_header_branch
    %11 = sbr.rel (%p9) target = $region8
  $region5: #{cross_entropy_loss_2d.1} parent=0 // loop_body
    %s13 = ssub.s32 %s8, 1
    %s14 = ssub.s32 %s8, 2
    %s21 = sadd.s32 1, %s16
    %p22 = scmp.ge.s32.totalorder %s21, 1
    %s23 = scalar_select %p22, 0, %s21
    %s24 = sadd.s32 1, %s15
    %s25 = scalar_select %p22, %s24, %s15
    %p26 = scmp.ge.s32.totalorder %s25, 2
    %s27 = scalar_select %p26, 0, %s25
    %s28 = ssub.s32 %s15, %s27
    %s29 = ssub.s32 %s16, %s23
    %s30 = sor.u32 %s28, %s29
    %p31 = scmp.eq.s32.totalorder %s30, 0
    %s33 = sadd.s32 %s32, 1
    %s34 = scalar_select %p31, %s32, %s33
    %p37 = pneg %p31
    %p38 = scmp.eq.s32.totalorder %s8, 1
    %p39 = por %p37, %p38
    %p40 = scmp.ne.s32.totalorder %s32, %s35
    %p41 = scmp.eq.s32.totalorder %s8, 0
    %p42 = por %p40, %p41
    %p43 = scmp.ne.s32.totalorder %s32, %s35
    %p44 = scmp.eq.s32.totalorder %s13, 1
    %p45 = por %p43, %p44
    %p46 = scmp.ne.s32.totalorder %s35, %s36
    %p47 = scmp.eq.s32.totalorder %s13, 0
    %p48 = por %p46, %p47
    %p49 = scmp.ne.s32.totalorder %s35, %s36
    %p50 = scmp.eq.s32.totalorder %s14, 1
    %p51 = por %p49, %p50
    %p53 = scmp.ne.s32.totalorder %s36, %s52
    %p54 = scmp.eq.s32.totalorder %s14, 0
    %p55 = por %p53, %p54
    %s56 = ssub.s32 %s15, %s27
    %s57 = ssub.s32 %s16, %s23
    %s58 = sor.u32 %s56, %s57
    %p59 = scmp.eq.s32.totalorder %s58, 0
    %s61 = sadd.s32 %s60, 1
    %s62 = scalar_select %p59, %s60, %s61
    %p65 = pneg %p59
    %p66 = scmp.eq.s32.totalorder %s8, 1
    %p67 = por %p65, %p66
    %p68 = scmp.ne.s32.totalorder %s60, %s63
    %p69 = scmp.eq.s32.totalorder %s8, 0
    %p70 = por %p68, %p69
    %p71 = scmp.ne.s32.totalorder %s60, %s63
    %p72 = scmp.eq.s32.totalorder %s13, 1
    %p73 = por %p71, %p72
    %p74 = scmp.ne.s32.totalorder %s63, %s64
    %p75 = scmp.eq.s32.totalorder %s13, 0
    %p76 = por %p74, %p75
    %p77 = scmp.ne.s32.totalorder %s63, %s64
    %p78 = scmp.eq.s32.totalorder %s14, 1
    %p79 = por %p77, %p78
    %p81 = scmp.ne.s32.totalorder %s64, %s80
    %p82 = scmp.eq.s32.totalorder %s14, 0
    %p83 = por %p81, %p82
    %s84 = ssub.s32 %s15, %s27
    %s85 = ssub.s32 %s16, %s23
    %s86 = sor.u32 %s84, %s85
    %p87 = scmp.eq.s32.totalorder %s86, 0
    %s89 = sadd.s32 %s88, 1
    %s90 = scalar_select %p87, %s88, %s89
    %p93 = pneg %p87
    %p94 = scmp.eq.s32.totalorder %s8, 1
    %p95 = por %p93, %p94
    %p96 = scmp.ne.s32.totalorder %s88, %s91
    %p97 = scmp.eq.s32.totalorder %s8, 0
    %p98 = por %p96, %p97
    %p99 = scmp.ne.s32.totalorder %s88, %s91
    %p100 = scmp.eq.s32.totalorder %s13, 1
    %p101 = por %p99, %p100
    %p102 = scmp.ne.s32.totalorder %s91, %s92
    %p103 = scmp.eq.s32.totalorder %s13, 0
    %p104 = por %p102, %p103
    %p105 = scmp.ne.s32.totalorder %s91, %s92
    %p106 = scmp.eq.s32.totalorder %s14, 1
    %p107 = por %p105, %p106
    %p109 = scmp.ne.s32.totalorder %s92, %s108
    %p110 = scmp.eq.s32.totalorder %s14, 0
    %p111 = por %p109, %p110
    %p112 = scmp.le.s32.totalorder 1, %s8
    %p113 = scmp.lt.s32.totalorder %s8, 3
    %p114 = pnand %p112, %p113
    %p115 = pneg %p114
    // Predicated region
    $region9: #{cross_entropy_loss_2d.1} parent=5 // pred_check
      _
    $region10: #{cross_entropy_loss_2d.1} parent=5 // pred_check_branch
      %117 = sbr.rel (%p114) target = $region12
    $region11: #{cross_entropy_loss_2d.1} parent=5 // pred_region
      %s118 = ssub.s32 %s8, 1
    $region12: #{cross_entropy_loss_2d.1} parent=5 // pred_fallthru
      _
    %p119 = scmp.lt.s32.totalorder %s8, 2
    // Predicated region
    $region13: #{cross_entropy_loss_2d.1} parent=5 // pred_check
      %p120 = pneg %p119
    $region14: #{cross_entropy_loss_2d.1} parent=5 // pred_check_branch
      %122 = sbr.rel (%p120) target = $region16
    $region15: #{cross_entropy_loss_2d.1} parent=5 // pred_region
      // Predicated region
      $region17: #{cross_entropy_loss_2d.1} parent=15 // pred_check
        %p123 = pneg %p42
      $region18: #{cross_entropy_loss_2d.1} parent=15 // pred_check_branch
        %125 = sbr.rel (%p123) target = $region20
      $region19: #{cross_entropy_loss_2d.1} parent=15 // pred_region
        %s126 = smul.u32 2, %s16
        %p127 = scmp.lt.s32.totalorder %s15, 1
        %s128 = scalar_select %p127, %s15, 1
        %p129 = scmp.lt.s32.totalorder %s126, 1
        %s130 = scalar_select %p129, %s126, 1
        %s131 = smul.addr %s128, 2
        %s132 = sadd.s32 %s130, %s131
        %s133 = smul.addr %s132, 4
        %s134 = scalar_lea.vmem %s0, %s133
        %s135 = smul.u32 2, %s16
      $region20: #{cross_entropy_loss_2d.1} parent=15 // pred_fallthru
        _
      // Predicated region
      $region21: #{cross_entropy_loss_2d.1} parent=15 // pred_check
        %p136 = pneg %p70
      $region22: #{cross_entropy_loss_2d.1} parent=15 // pred_check_branch
        %138 = sbr.rel (%p136) target = $region24
      $region23: #{cross_entropy_loss_2d.1} parent=15 // pred_region
        %s139 = smul.u32 2, %s16
        %p140 = scmp.lt.s32.totalorder %s15, 1
        %s141 = scalar_select %p140, %s15, 1
        %p142 = scmp.lt.s32.totalorder %s139, 1
        %s143 = scalar_select %p142, %s139, 1
        %s144 = smul.addr %s141, 2
        %s145 = sadd.s32 %s143, %s144
        %s146 = scalar_lea.vmem %s1, %s145
        %s147 = smul.u32 2, %s16
      $region24: #{cross_entropy_loss_2d.1} parent=15 // pred_fallthru
        _
    $region16: #{cross_entropy_loss_2d.1} parent=5 // pred_fallthru
      _
    %p148 = scmp.le.s32.totalorder 1, %s8
    %p149 = scmp.lt.s32.totalorder %s8, 3
    %p150 = pnand %p148, %p149
    %p151 = pneg %p150
    // Predicated region
    $region25: #{cross_entropy_loss_2d.1} parent=5 // pred_check
      _
    $region26: #{cross_entropy_loss_2d.1} parent=5 // pred_check_branch
      %153 = sbr.rel (%p150) target = $region28
    $region27: #{cross_entropy_loss_2d.1} parent=5 // pred_region
      %s154 = ssub.s32 %s8, 1
      %s155 = smul.u32 2, %s18
      %p156 = scmp.lt.s32.totalorder %s17, 1
      %s157 = scalar_select %p156, %s17, 1
      %p158 = scmp.lt.s32.totalorder %s155, 1
      %s159 = scalar_select %p158, %s155, 1
      %s160 = smul.addr %s157, 2
      %s161 = sadd.s32 %s159, %s160
      %s162 = smul.addr %s161, 4
      %s163 = scalar_lea.vmem %s0, %s162
      %p164 = pneg %p48
      %p165 = pneg %p45
      %s166 = smul.u32 2, %s18
      %p167 = scmp.lt.s32.totalorder %s17, 1
      %s168 = scalar_select %p167, %s17, 1
      %p169 = scmp.lt.s32.totalorder %s166, 1
      %s170 = scalar_select %p169, %s166, 1
      %s171 = smul.addr %s168, 2
      %s172 = sadd.s32 %s170, %s171
      %s173 = scalar_lea.vmem %s1, %s172
      %p174 = pneg %p76
      %p175 = pneg %p73
      %p176 = pneg %p104
      %p177 = pneg %p101
      %p178 = scmp.lt.s32.totalorder %s17, 1
      %s179 = scalar_select %p178, %s17, 1
      %p180 = scmp.lt.s32.totalorder %s18, 0
      %s181 = scalar_select %p180, %s18, 0
      %s182 = sadd.s32 %s181, %s179
      %s183 = scalar_lea.vmem %s2, %s182
      %s184 = smul.u32 2, %s18
      %p185 = scmp.lt.s32.totalorder %s17, 1
      %s186 = scalar_select %p185, %s17, 1
      %p187 = scmp.lt.s32.totalorder %s184, 1
      %s188 = scalar_select %p187, %s184, 1
      %s189 = smul.addr %s186, 2
      %s190 = sadd.s32 %s188, %s189
      %s191 = smul.addr %s190, 4
      %s192 = scalar_lea.vmem %s0, %s191
      %s193 = smul.u32 2, %s18
      %s194 = smul.u32 2, %s18
      %p195 = scmp.lt.s32.totalorder %s17, 1
      %s196 = scalar_select %p195, %s17, 1
      %p197 = scmp.lt.s32.totalorder %s194, 1
      %s198 = scalar_select %p197, %s194, 1
      %s199 = smul.addr %s196, 2
      %s200 = sadd.s32 %s198, %s199
      %s201 = scalar_lea.vmem %s1, %s200
      %s202 = smul.u32 2, %s18
      %p203 = scmp.lt.s32.totalorder %s17, 1
      %s204 = scalar_select %p203, %s17, 1
      %p205 = scmp.lt.s32.totalorder %s18, 0
      %s206 = scalar_select %p205, %s18, 0
      %s207 = sadd.s32 %s206, %s204
      %s208 = scalar_lea.vmem %s2, %s207
      %v209 = vld [vmem:[%s192] sm:$0xff]
      %v210 = vld [vmem:[%s201] sm:$0x3]
      %212 = vst [vmem:[#allocation1] ss:$2 sm:$0xff] %v209
      %v213 = vld.sshfl [vmem:[#allocation1] sm:$0xff pattern:$0x75316420]
      %v214 = vld.sshfl [vmem:[#allocation1 + $0x8] sm:$0xff pattern:$0x75316420]
      %vm217 = vcmask 1043456
      %v218 = vsel %vm217, %v213, -inf
      %v219 = vrot.slane %v218, 4
      %v220 = vmax.f32 %v218, %v219
      %v221 = vrot.slane %v220, 2
      %v222 = vmax.f32 %v220, %v221
      %v223 = vrot.slane %v222, 1
      %v224 = vmax.f32 %v222, %v223
      %v225 = vsel %vm217, %v214, -inf
      %v226 = vrot.slane %v225, 4
      %v227 = vmax.f32 %v225, %v226
      %v228 = vrot.slane %v227, 2
      %v229 = vmax.f32 %v227, %v228
      %v230 = vrot.slane %v229, 1
      %v231 = vmax.f32 %v229, %v230
      %v234 = vrot.slane %v231, 4
      %v235 = vsel %vm217, %v224, %v234
      %v237 = vsub.f32 %v209, %v235
      %v238 = vmul.f32 %v237, 1.442695
      %v239 = vpow.pop %v238
      %241 = vst [vmem:[#allocation1] ss:$2 sm:$0xff] %v239
      %v242 = vld.sshfl [vmem:[#allocation1] sm:$0xff pattern:$0x75316420]
      %v243 = vld.sshfl [vmem:[#allocation1 + $0x8] sm:$0xff pattern:$0x75316420]
      %v246 = vsel %vm217, %v242, 0.0
      %v247 = vrot.slane %v246, 4
      %v248 = vadd.f32 %v246, %v247
      %v249 = vrot.slane %v248, 2
      %v250 = vadd.f32 %v248, %v249
      %v251 = vrot.slane %v250, 1
      %v252 = vadd.f32 %v250, %v251
      %v253 = vsel %vm217, %v243, 0.0
      %v254 = vrot.slane %v253, 4
      %v255 = vadd.f32 %v253, %v254
      %v256 = vrot.slane %v255, 2
      %v257 = vadd.f32 %v255, %v256
      %v258 = vrot.slane %v257, 1
      %v259 = vadd.f32 %v257, %v258
      %v260 = vlog2.pop %v252
      %v261 = vmul.f32 %v260, 0.6931472
      %v262 = vlog2.pop %v259
      %v263 = vmul.f32 %v262, 0.6931472
      %v264 = vlaneseq
      %v265 = vshrl.u32 %v264, 7
      %v266 = vperm.slane %v210, 0
      %v267 = vperm.slane %v210, 1
      %vm268 = vcmp.eq.s32.totalorder %v265, %v266
      %vm269 = vcmp.eq.s32.totalorder %v265, %v267
      %270 = vst [vmem:[#allocation1] ss:$2 sm:$0xff] %v209
      %v271 = vld.sshfl [vmem:[#allocation1] sm:$0xff pattern:$0x75316420]
      %v272 = vld.sshfl [vmem:[#allocation1 + $0x8] sm:$0xff pattern:$0x75316420]
      %v275 = vsel %vm268, %v271, 0.0
      %v276 = vsel %vm269, %v272, 0.0
      %v277 = vsel %vm217, %v275, 0.0
      %v278 = vrot.slane %v277, 4
      %v279 = vadd.f32 %v277, %v278
      %v280 = vrot.slane %v279, 2
      %v281 = vadd.f32 %v279, %v280
      %v282 = vrot.slane %v281, 1
      %v283 = vadd.f32 %v281, %v282
      %v284 = vsel %vm217, %v276, 0.0
      %v285 = vrot.slane %v284, 4
      %v286 = vadd.f32 %v284, %v285
      %v287 = vrot.slane %v286, 2
      %v288 = vadd.f32 %v286, %v287
      %v289 = vrot.slane %v288, 1
      %v290 = vadd.f32 %v288, %v289
      %v291 = vadd.f32 %v224, %v261
      %v292 = vadd.f32 %v231, %v263
      %v293 = vsub.f32 %v291, %v283
      %v294 = vsub.f32 %v292, %v290
      %s295 = smul.u32 %s18, 256
      %v296 = vlaneseq
      %v297 = vand.u32 %v296, 127
      %v298 = vadd.s32 %v297, 128
      %v299 = vstv %s295
      %v300 = vadd.s32 %v299, %v297
      %v301 = vadd.s32 %v299, %v298
      %vm302 = vcmp.lt.s32.totalorder %v300, 256
      %vm303 = vcmp.lt.s32.totalorder %v301, 256
      %v304 = vsel %vm302, %v293, 0.0
      %v305 = vsel %vm303, %v294, 0.0
      %v308 = vrot.slane %v305, 4
      %v309 = vsel %vm217, %v304, %v308
      %v312 = vunpack.c.l.s4 1935823168
      %v313 = vunpack.c.0.s8 %v312
      %v314 = vperm.slane %v309, %v313
      %vm315 = vcmask 1041408
      %v316 = vsel %vm315, %v314, 0.0
      %v317 = vrot.slane %v316, 4
      %v318 = vadd.f32 %v316, %v317
      %v319 = vrot.slane %v318, 2
      %v320 = vadd.f32 %v318, %v319
      %v321 = vrot.slane %v320, 1
      %v322 = vadd.f32 %v320, %v321
      %323 = vst [vmem:[%s208] sm:$0x1] %v322
      %p324 = scmp.lt.s32.totalorder %s17, 1
      %s325 = scalar_select %p324, %s17, 1
      %p326 = scmp.lt.s32.totalorder %s18, 0
      %s327 = scalar_select %p326, %s18, 0
      %s328 = sadd.s32 %s327, %s325
      %s329 = scalar_lea.vmem %s2, %s328
      // Predicated region
      $region29: #{cross_entropy_loss_2d.1} parent=27 // pred_check
        %p330 = pneg %p101
      $region30: #{cross_entropy_loss_2d.1} parent=27 // pred_check_branch
        %332 = sbr.rel (%p330) target = $region32
      $region31: #{cross_entropy_loss_2d.1} parent=27 // pred_region
        _
      $region32: #{cross_entropy_loss_2d.1} parent=27 // pred_fallthru
        _
    $region28: #{cross_entropy_loss_2d.1} parent=5 // pred_fallthru
      _
    %p333 = scmp.le.s32.totalorder 2, %s8
    // Predicated region
    $region33: #{cross_entropy_loss_2d.1} parent=5 // pred_check
      %p334 = pneg %p333
    $region34: #{cross_entropy_loss_2d.1} parent=5 // pred_check_branch
      %336 = sbr.rel (%p334) target = $region36
    $region35: #{cross_entropy_loss_2d.1} parent=5 // pred_region
      %s337 = ssub.s32 %s8, 2
      // Predicated region
      $region37: #{cross_entropy_loss_2d.1} parent=35 // pred_check
        %p338 = pneg %p107
      $region38: #{cross_entropy_loss_2d.1} parent=35 // pred_check_branch
        %340 = sbr.rel (%p338) target = $region40
      $region39: #{cross_entropy_loss_2d.1} parent=35 // pred_region
        %p341 = scmp.lt.s32.totalorder %s19, 1
        %s342 = scalar_select %p341, %s19, 1
        %p343 = scmp.lt.s32.totalorder %s20, 0
        %s344 = scalar_select %p343, %s20, 0
        %s345 = sadd.s32 %s344, %s342
        %s346 = scalar_lea.vmem %s2, %s345
      $region40: #{cross_entropy_loss_2d.1} parent=35 // pred_fallthru
        _
    $region36: #{cross_entropy_loss_2d.1} parent=5 // pred_fallthru
      _
  $region6: #{cross_entropy_loss_2d.1} parent=0 // loop_footer
    %s12 = sadd.s32 1, %s8
  $region7: #{cross_entropy_loss_2d.1} parent=0 // loop_footer_branch
    %7 = sbr.rel target = $region3
  $region8: #{cross_entropy_loss_2d.1} parent=0 // loop_exit
    _

</llo_original>
